<compile_context>
chip_gen: v7x
topology: tpu7x:2x2x1
jax: 0.10.0
libtpu: 0.0.40
codegen_flags: <defaults>
</compile_context>

<pallas_src>
import functools
import math

import jax
import jax.numpy as jnp
from jax import lax
from jax.experimental import pallas as pl
from jax.experimental.pallas import tpu as pltpu


# ----------------------------------------------------------------------------
# Small helpers
# ----------------------------------------------------------------------------
def _vmem_capacity_bytes():
    # Physical per-core VMEM; conservative default if the query API is absent.
    try:
        return int(pltpu.get_tpu_info().vmem_capacity_bytes)
    except Exception:
        return 64 * 1024 * 1024


def _vmem_limit(needed_bytes):
    """Scoped-VMEM request: tile math + 25% headroom, floored at 32 MiB and
    capped below physical capacity."""
    cap = int(_vmem_capacity_bytes() * 0.9)
    return int(min(max(needed_bytes * 5 // 4, 32 * 1024 * 1024), cap))


def _pick_tile(n, cap):
    """Largest power-of-two tile (>= 8, <= cap) dividing n, else the full extent."""
    t = cap
    while t >= 8:
        if n % t == 0:
            return t
        t //= 2
    return n


def _row_tile_cap():
    # v5e/v6e (128 MiB VMEM): allow 1024-row projection tiles; v7x (64 MiB): 512.
    return 1024 if _vmem_capacity_bytes() >= (100 << 20) else 512


def _weight_spec(shape, index_map, single_buffer):
    """Spec for a resident (constant index_map) weight/bias.  Single buffering
    halves its VMEM footprint; fall back when pipeline_mode is unavailable."""
    if single_buffer and hasattr(pl, "Buffered"):
        try:
            return pl.BlockSpec(shape, index_map, pipeline_mode=pl.Buffered(1))
        except TypeError:
            pass
    return pl.BlockSpec(shape, index_map)


def _call_with_weight_buffer_fallback(build_and_call):
    """Try single-buffered resident weights; retry with default double
    buffering if this jax/Mosaic version rejects the pipeline_mode request."""
    try:
        return build_and_call(True)
    except Exception:
        return build_and_call(False)


# ----------------------------------------------------------------------------
# Kernel 1: fused QKV projection, tiled over rows M = B*S
# ----------------------------------------------------------------------------
def _qkv_proj_kernel(x_ref, w_ref, b_ref, o_ref):
    # bf16 MXU operands, f32 accumulation; bias added in f32, stored bf16.
    acc = jnp.dot(x_ref[...].astype(jnp.bfloat16), w_ref[...],
                  preferred_element_type=jnp.float32)
    o_ref[...] = (acc + b_ref[...]).astype(o_ref.dtype)


def qkv_proj(x2d, wqkv, bqkv, *, tm):
    """x2d: (M, D) f32, wqkv: (D, 3D) bf16, bqkv: (1, 3D) f32 -> (M, 3D) bf16."""
    M, D = x2d.shape
    N = wqkv.shape[1]
    needed = (2 * tm * D * 4        # x tile, f32, double-buffered
              + 2 * D * N * 2       # fused weight (bf16; x2 if double-buffered)
              + 2 * N * 4           # fused bias
              + 2 * tm * N * 2      # output tile, bf16, double-buffered
              + tm * N * 4)         # f32 accumulator temporaries

    def call(single_buffer):
        return pl.pallas_call(
            _qkv_proj_kernel,
            out_shape=jax.ShapeDtypeStruct((M, N), jnp.bfloat16),
            grid=(M // tm,),
            in_specs=[
                pl.BlockSpec((tm, D), lambda i: (i, 0)),
                _weight_spec((D, N), lambda i: (0, 0), single_buffer),
                _weight_spec((1, N), lambda i: (0, 0), single_buffer),
            ],
            out_specs=pl.BlockSpec((tm, N), lambda i: (i, 0)),
            compiler_params=pltpu.CompilerParams(
                dimension_semantics=("parallel",),
                vmem_limit_bytes=_vmem_limit(needed)),
        )(x2d, wqkv, bqkv)

    return _call_with_weight_buffer_fallback(call)


# ----------------------------------------------------------------------------
# Kernel 2: flash attention + output projection + residual, fused
# ----------------------------------------------------------------------------
def _flash_attn_kernel(q_ref, k_ref, v_ref, res_ref, wf_ref, bf_ref, o_ref,
                       m_sc, l_sc, ctx_sc, out_sc, *, d_k):
    h = pl.program_id(2)
    ki = pl.program_id(3)
    last_h = pl.num_programs(2) - 1
    last_kv = pl.num_programs(3) - 1

    @pl.when(jnp.logical_and(h == 0, ki == 0))
    def _init_out():
        out_sc[...] = jnp.zeros_like(out_sc)

    @pl.when(ki == 0)
    def _init_head():
        m_sc[...] = jnp.full_like(m_sc, -jnp.inf)
        l_sc[...] = jnp.zeros_like(l_sc)
        ctx_sc[...] = jnp.zeros_like(ctx_sc)

    q = q_ref[0, 0]   # (tq, d_k) bf16 (1/sqrt(d_k) already folded into Wq/bq)
    k = k_ref[0, 0]   # (tk, d_k) bf16
    v = v_ref[0, 0]   # (tk, d_k) bf16

    # QK^T contracting the last axes directly (no transposed copy of K).
    # TODO(synk): confirm via pl.lower_as_mlir that no vxpose is emitted here.
    s = lax.dot_general(q, k, (((1,), (1,)), ((), ())),
                        preferred_element_type=jnp.float32)          # (tq, tk)

    # TODO(synk): additive attention mask (-inf fill) would be applied to `s`.
    m_prev = m_sc[...]
    m_new = jnp.maximum(m_prev, jnp.max(s, axis=-1, keepdims=True))
    alpha = jnp.exp(m_prev - m_new)
    p = jnp.exp(s - m_new)
    l_sc[...] = alpha * l_sc[...] + jnp.sum(p, axis=-1, keepdims=True)
    ctx_sc[...] = alpha * ctx_sc[...] + jnp.dot(
        p.astype(v.dtype), v, preferred_element_type=jnp.float32)    # (tq, d_k)
    m_sc[...] = m_new

    # All KV blocks of this head done: normalize and fold the head merge into
    # the output projection (out_acc += ctx_h @ wf[h*d_k:(h+1)*d_k, :]).
    @pl.when(ki == last_kv)
    def _finish_head():
        ctx = ctx_sc[...] * pl.reciprocal(l_sc[...], approx=True)
        row0 = pl.multiple_of(h * d_k, d_k)
        wf_h = wf_ref[pl.ds(row0, d_k), :]                           # (d_k, D)
        out_sc[...] += jnp.dot(ctx.astype(wf_h.dtype), wf_h,
                               preferred_element_type=jnp.float32)

    # Last head & last KV block: bias + residual, write the lane-dense slab.
    @pl.when(jnp.logical_and(h == last_h, ki == last_kv))
    def _finish_tile():
        o_ref[0] = (out_sc[...] + bf_ref[...] + res_ref[0]).astype(o_ref.dtype)


def flash_attention_out_proj(q_hm, k_hm, v_hm, x_res, wf, bf2d, *, tq, tk):
    """q/k/v: (B, H, S, d_k) bf16 head-major; x_res: (B, S, D) f32 residual;
    wf: (D, D) bf16; bf2d: (1, D) f32 -> (B, S, D) f32."""
    B, H, S, d_k = q_hm.shape
    D = x_res.shape[-1]
    grid = (B, S // tq, H, S // tk)
    kernel = functools.partial(_flash_attn_kernel, d_k=d_k)
    # TODO(synk): at very large D, tile wf over output columns instead of
    # keeping the full (D, D) weight resident.
    needed = (2 * tq * d_k * 2 + 4 * tk * d_k * 2   # q + k/v blocks (bf16, 2-buf)
              + 2 * tq * D * 4                      # residual (f32, 2-buf)
              + 2 * D * D * 2 + 2 * D * 4           # resident wf (bf16) + bf
              + 2 * tq * D * 4                      # output tile (f32, 2-buf)
              + (2 * tq + tq * d_k + tq * D) * 4    # m/l/ctx/out scratch
              + 2 * tq * tk * 4)                    # score/prob temporaries

    def call(single_buffer):
        return pl.pallas_call(
            kernel,
            out_shape=jax.ShapeDtypeStruct((B, S, D), jnp.float32),
            grid=grid,
            in_specs=[
                pl.BlockSpec((1, 1, tq, d_k), lambda b, qi, h, ki: (b, h, qi, 0)),
                pl.BlockSpec((1, 1, tk, d_k), lambda b, qi, h, ki: (b, h, ki, 0)),
                pl.BlockSpec((1, 1, tk, d_k), lambda b, qi, h, ki: (b, h, ki, 0)),
                pl.BlockSpec((1, tq, D), lambda b, qi, h, ki: (b, qi, 0)),
                _weight_spec((D, D), lambda b, qi, h, ki: (0, 0), single_buffer),
                _weight_spec((1, D), lambda b, qi, h, ki: (0, 0), single_buffer),
            ],
            out_specs=pl.BlockSpec((1, tq, D), lambda b, qi, h, ki: (b, qi, 0)),
            scratch_shapes=[
                pltpu.VMEM((tq, 1), jnp.float32),    # running max m
                pltpu.VMEM((tq, 1), jnp.float32),    # running denom l
                pltpu.VMEM((tq, d_k), jnp.float32),  # per-head context acc
                pltpu.VMEM((tq, D), jnp.float32),    # out-projection acc
            ],
            compiler_params=pltpu.CompilerParams(
                dimension_semantics=("parallel", "parallel",
                                     "arbitrary", "arbitrary"),
                vmem_limit_bytes=_vmem_limit(needed)),
        )(q_hm, k_hm, v_hm, x_res, wf, bf2d)

    return _call_with_weight_buffer_fallback(call)


# ----------------------------------------------------------------------------
# Module wrapper
# ----------------------------------------------------------------------------
def prepare_params(params, h):
    """One-time parameter prep: fuse [Wq|Wk|Wv], fold 1/sqrt(d_k) into Wq & bq,
    and pre-cast MXU weight operands to bf16."""
    D = params["wq"].shape[0]
    assert D % h == 0, "d_model is not divisible by h"
    d_k = D // h
    scale = 1.0 / math.sqrt(d_k)
    wqkv = jnp.concatenate(
        [params["wq"] * scale, params["wk"], params["wv"]],
        axis=1).astype(jnp.bfloat16)
    bqkv = jnp.concatenate(
        [params["bq"] * scale, params["bk"], params["bv"]]
    ).reshape(1, 3 * D).astype(jnp.float32)
    return {
        "wqkv": wqkv,
        "bqkv": bqkv,
        "wf": params["wf"].astype(jnp.bfloat16),
        "bf": params["bf"].reshape(1, D).astype(jnp.float32),
        "h": h,
        "d_k": d_k,
    }


def multi_head_attention_block(x, prepped):
    """x: (B, S, D) f32 -> (B, S, D) f32.  Eval mode (dropout = identity)."""
    B, S, D = x.shape
    h, d_k = prepped["h"], prepped["d_k"]

    # Kernel 1: fused QKV projection over rows M = B*S, bf16 output.
    tm = _pick_tile(B * S, _row_tile_cap())
    qkv2d = qkv_proj(x.reshape(B * S, D), prepped["wqkv"], prepped["bqkv"], tm=tm)

    # One cheap XLA reshape/transpose to head-major (3, B, H, S, d_k) so the
    # attention kernel consumes whole (tile, d_k) slabs per (batch, head).
    # TODO(synk): for d_k >= 128 this transpose can be skipped (column-blocked
    # BlockSpec straight into the (B, S, 3D) array is then legal).
    qkv_hm = qkv2d.reshape(B, S, 3, h, d_k).transpose(2, 0, 3, 1, 4)

    # Kernel 2: flash attention + output projection + residual, fused.
    tq = _pick_tile(S, 256)
    tk = _pick_tile(S, 256)
    return flash_attention_out_proj(qkv_hm[0], qkv_hm[1], qkv_hm[2], x,
                                    prepped["wf"], prepped["bf"], tq=tq, tk=tk)


# Pure-JAX f32 reference (matches the PyTorch forward in eval mode).
def reference(x, params, h):
    B, S, D = x.shape
    d_k = D // h

    def lin(t, w, b):
        return t @ w + b

    q = lin(x, params["wq"], params["bq"]).reshape(B, S, h, d_k).transpose(0, 2, 1, 3)
    k = lin(x, params["wk"], params["bk"]).reshape(B, S, h, d_k).transpose(0, 2, 1, 3)
    v = lin(x, params["wv"], params["bv"]).reshape(B, S, h, d_k).transpose(0, 2, 1, 3)
    s = jnp.einsum("bhqd,bhkd->bhqk", q, k) / math.sqrt(d_k)
    a = jax.nn.softmax(s, axis=-1)
    o = jnp.einsum("bhqk,bhkd->bhqd", a, v).transpose(0, 2, 1, 3).reshape(B, S, D)
    return lin(o, params["wf"], params["bf"]) + x


if __name__ == "__main__":
    B, S, D, H = 2, 8, 32, 4  # d_model=32, h=4, d_k=8
    key = jax.random.PRNGKey(0)
    kx, kq, kk, kv, kf, kbq, kbk, kbv, kbf = jax.random.split(key, 9)

    lim = 1.0 / math.sqrt(D)
    params = {
        # Weights stored (in_features, out_features), i.e. pre-transposed
        # relative to torch.nn.Linear.weight.
        "wq": jax.random.uniform(kq, (D, D), jnp.float32, -lim, lim),
        "wk": jax.random.uniform(kk, (D, D), jnp.float32, -lim, lim),
        "wv": jax.random.uniform(kv, (D, D), jnp.float32, -lim, lim),
        "wf": jax.random.uniform(kf, (D, D), jnp.float32, -lim, lim),
        "bq": jax.random.uniform(kbq, (D,), jnp.float32, -lim, lim),
        "bk": jax.random.uniform(kbk, (D,), jnp.float32, -lim, lim),
        "bv": jax.random.uniform(kbv, (D,), jnp.float32, -lim, lim),
        "bf": jax.random.uniform(kbf, (D,), jnp.float32, -lim, lim),
    }
    x = jax.random.normal(kx, (B, S, D), jnp.float32)

    prepped = prepare_params(params, H)
    out = jax.block_until_ready(multi_head_attention_block(x, prepped))
    ref = reference(x, params, H)

    assert out.shape == (B, S, D)
    # bf16 MXU operands + approximate EUP reciprocal in the softmax denominator
    # => relaxed tolerance vs. the f32 reference.
    assert jnp.allclose(out, ref, atol=3e-2, rtol=3e-2), (
        "mismatch vs reference: max abs err "
        f"{float(jnp.max(jnp.abs(out - ref)))}")
    print("KERNEL_OK")
</pallas_src>

<mosaic_0001>
module attributes {stable_mosaic.version = 11 : i64} {
  func.func @_qkv_proj_kernel(%arg0: i32, %arg1: memref<16x32xf32, #tpu.memory_space<vmem>>, %arg2: memref<32x96xbf16, #tpu.memory_space<vmem>>, %arg3: memref<1x96xf32, #tpu.memory_space<vmem>>, %arg4: memref<16x96xbf16, #tpu.memory_space<vmem>>) attributes {dimension_semantics = [#tpu.dimension_semantics<parallel>], iteration_bounds = array<i64: 1>, scalar_prefetch = 0 : i64, scratch_operands = 0 : i64, tpu.core_type = #tpu.core_type<tc>, window_params = [{transform_indices = @transform_0, window_bounds = array<i64: 16, 32>}, {pipeline_mode = #tpu.pipeline_mode<synchronous>, transform_indices = @transform_1, window_bounds = array<i64: 32, 96>}, {pipeline_mode = #tpu.pipeline_mode<synchronous>, transform_indices = @transform_2, window_bounds = array<i64: 1, 96>}, {transform_indices = @transform_3, window_bounds = array<i64: 16, 96>}]} {
    %c0 = arith.constant 0 : index
    %c0_0 = arith.constant 0 : index
    %0 = vector.load %arg1[%c0, %c0_0] : memref<16x32xf32, #tpu.memory_space<vmem>>, vector<16x32xf32>
    %1 = arith.truncf %0 : vector<16x32xf32> to vector<16x32xbf16>
    %c0_1 = arith.constant 0 : index
    %c0_2 = arith.constant 0 : index
    %2 = vector.load %arg2[%c0_1, %c0_2] : memref<32x96xbf16, #tpu.memory_space<vmem>>, vector<32x96xbf16>
    %cst = arith.constant dense<0.000000e+00> : vector<16x96xf32>
    %3 = tpu.matmul %1, %2, %cst {dimension_numbers = #tpu.dot_dimension_numbers<[1], [0], [0], [1], [0, 0, 1, 1], [], []>} : vector<16x32xbf16>, vector<32x96xbf16>, vector<16x96xf32> -> vector<16x96xf32>
    %c0_3 = arith.constant 0 : index
    %c0_4 = arith.constant 0 : index
    %4 = vector.load %arg3[%c0_3, %c0_4] : memref<1x96xf32, #tpu.memory_space<vmem>>, vector<1x96xf32>
    %5 = vector.broadcast %4 : vector<1x96xf32> to vector<16x96xf32>
    %6 = arith.addf %3, %5 : vector<16x96xf32>
    %7 = arith.truncf %6 : vector<16x96xf32> to vector<16x96xbf16>
    %c0_5 = arith.constant 0 : index
    %c0_6 = arith.constant 0 : index
    %8 = vector.load %arg4[%c0_5, %c0_6] : memref<16x96xbf16, #tpu.memory_space<vmem>>, vector<16x96xbf16>
    tpu.vector_store %arg4[%c0_5, %c0_6], %7 {strides = array<i32>} : memref<16x96xbf16, #tpu.memory_space<vmem>>, vector<16x96xbf16>,
    return
  }
  func.func @transform_0(%arg0: i32) -> (i32, i32) {
    %c0_i32 = arith.constant 0 : i32
    %c0_i32_0 = arith.constant 0 : i32
    return %arg0, %c0_i32 : i32, i32
  }
  func.func @transform_1(%arg0: i32) -> (i32, i32) {
    %c0_i32 = arith.constant 0 : i32
    %c0_i32_0 = arith.constant 0 : i32
    %c0_i32_1 = arith.constant 0 : i32
    return %c0_i32, %c0_i32_0 : i32, i32
  }
  func.func @transform_2(%arg0: i32) -> (i32, i32) {
    %c0_i32 = arith.constant 0 : i32
    %c0_i32_0 = arith.constant 0 : i32
    %c0_i32_1 = arith.constant 0 : i32
    return %c0_i32, %c0_i32_0 : i32, i32
  }
  func.func @transform_3(%arg0: i32) -> (i32, i32) {
    %c0_i32 = arith.constant 0 : i32
    %c0_i32_0 = arith.constant 0 : i32
    return %arg0, %c0_i32 : i32, i32
  }
}

module attributes {stable_mosaic.version = 11 : i64} {
  func.func @_qkv_proj_kernel(%arg0: i32, %arg1: memref<16x32xf32, #tpu.memory_space<vmem>>, %arg2: memref<32x96xbf16, #tpu.memory_space<vmem>>, %arg3: memref<1x96xf32, #tpu.memory_space<vmem>>, %arg4: memref<16x96xbf16, #tpu.memory_space<vmem>>) attributes {dimension_semantics = [#tpu.dimension_semantics<parallel>], iteration_bounds = array<i64: 1>, scalar_prefetch = 0 : i64, scratch_operands = 0 : i64, tpu.core_type = #tpu.core_type<tc>, window_params = [{transform_indices = @transform_0, window_bounds = array<i64: 16, 32>}, {pipeline_mode = #tpu.pipeline_mode<synchronous>, transform_indices = @transform_1, window_bounds = array<i64: 32, 96>}, {pipeline_mode = #tpu.pipeline_mode<synchronous>, transform_indices = @transform_2, window_bounds = array<i64: 1, 96>}, {transform_indices = @transform_3, window_bounds = array<i64: 16, 96>}]} {
    %c0 = arith.constant 0 : index
    %c0_0 = arith.constant 0 : index
    %0 = vector.load %arg1[%c0, %c0_0] : memref<16x32xf32, #tpu.memory_space<vmem>>, vector<16x32xf32>
    %1 = arith.truncf %0 : vector<16x32xf32> to vector<16x32xbf16>
    %c0_1 = arith.constant 0 : index
    %c0_2 = arith.constant 0 : index
    %2 = vector.load %arg2[%c0_1, %c0_2] : memref<32x96xbf16, #tpu.memory_space<vmem>>, vector<32x96xbf16>
    %cst = arith.constant dense<0.000000e+00> : vector<16x96xf32>
    %3 = tpu.matmul %1, %2, %cst {dimension_numbers = #tpu.dot_dimension_numbers<[1], [0], [0], [1], [0, 0, 1, 1], [], []>} : vector<16x32xbf16>, vector<32x96xbf16>, vector<16x96xf32> -> vector<16x96xf32>
    %c0_3 = arith.constant 0 : index
    %c0_4 = arith.constant 0 : index
    %4 = vector.load %arg3[%c0_3, %c0_4] : memref<1x96xf32, #tpu.memory_space<vmem>>, vector<1x96xf32>
    %5 = vector.broadcast %4 : vector<1x96xf32> to vector<16x96xf32>
    %6 = arith.addf %3, %5 : vector<16x96xf32>
    %7 = arith.truncf %6 : vector<16x96xf32> to vector<16x96xbf16>
    %c0_5 = arith.constant 0 : index
    %c0_6 = arith.constant 0 : index
    %8 = vector.load %arg4[%c0_5, %c0_6] : memref<16x96xbf16, #tpu.memory_space<vmem>>, vector<16x96xbf16>
    tpu.vector_store %arg4[%c0_5, %c0_6], %7 {strides = array<i32>} : memref<16x96xbf16, #tpu.memory_space<vmem>>, vector<16x96xbf16>,
    return
  }
  func.func @transform_0(%arg0: i32) -> (i32, i32) {
    %c0_i32 = arith.constant 0 : i32
    %c0_i32_0 = arith.constant 0 : i32
    return %arg0, %c0_i32 : i32, i32
  }
  func.func @transform_1(%arg0: i32) -> (i32, i32) {
    %c0_i32 = arith.constant 0 : i32
    %c0_i32_0 = arith.constant 0 : i32
    %c0_i32_1 = arith.constant 0 : i32
    return %c0_i32, %c0_i32_0 : i32, i32
  }
  func.func @transform_2(%arg0: i32) -> (i32, i32) {
    %c0_i32 = arith.constant 0 : i32
    %c0_i32_0 = arith.constant 0 : i32
    %c0_i32_1 = arith.constant 0 : i32
    return %c0_i32, %c0_i32_0 : i32, i32
  }
  func.func @transform_3(%arg0: i32) -> (i32, i32) {
    %c0_i32 = arith.constant 0 : i32
    %c0_i32_0 = arith.constant 0 : i32
    return %arg0, %c0_i32 : i32, i32
  }
}

</mosaic_0001>

<llo_original>
// kernel: tpu_custom_call.1
$region0: #{tpu_custom_call.1}
  #allocation0 [shape = 'u32[]', space=smem, size = 0x4, offset = 0x4, fixed_abs, tag = 'smem constant byte address 0x4 - core index']
  #allocation1 [shape = 'u32[144,128]{1,0:T(1,128)}', space=vmem, size = 0x12000, scoped, tag = 'internal scratch']
  %s0 = inlined_call_operand.hbm [shape: f32[16,32], index: 0, kind: input, shape index: {}]
  %s1 = inlined_call_operand.hbm [shape: bf16[32,96], index: 1, kind: input, shape index: {}]
  %s2 = inlined_call_operand.vmem [shape: f32[1,96], index: 2, kind: input, shape index: {}]
  %s3 = inlined_call_operand.hbm [shape: bf16[16,96], index: 3, kind: output, shape index: {}]
  %s4 = sld [smem:[#allocation0]]
  $region30: #{tpu_custom_call.1} parent=0
    _
  %s6 = ssub.s32 1, %s4
  %s7 = scalar_select 0, %s6, %s4
  $region1: #{tpu_custom_call.1} parent=0
    #allocation2 [shape = 'u8[8192]{0}', space=vmem, size = 0x2000, scoped, tag = 'input window, operand 0, single buffered']
    #allocation3 [shape = 's32[1]{0}', space=sflag, size = 0x4, scoped, tag = 'scoped memory for tpu_custom_call.1']
    #allocation4 [shape = 's32[1]{0}', space=sflag, size = 0x4, scoped, tag = 'scoped memory for tpu_custom_call.1']
    #allocation5 [shape = 'u8[8192]{0}', space=vmem, size = 0x2000, scoped, tag = 'input window, operand 1, single buffered']
    #allocation6 [shape = 's32[1]{0}', space=sflag, size = 0x4, scoped, tag = 'scoped memory for tpu_custom_call.1']
    #allocation7 [shape = 'u8[4096]{0}', space=vmem, size = 0x1000, scoped, tag = 'output window, operand 0, single buffered']
    %8 = vsyncpa [#allocation3], 0
    %9 = vsyncpa [#allocation6], 0
    %10 = vsyncpa [#allocation4], 0
    // Predicated region
    $region2: #{tpu_custom_call.1} parent=1 // pred_check
      _
    $region3: #{tpu_custom_call.1} parent=1 // pred_check_branch
      %12 = sbr.rel (0) target = $region5
    $region4: #{tpu_custom_call.1} parent=1 // pred_region
      %s14 = ssub.s32 256, 256
      %15 = vsyncadd [#allocation3], %s14
      %s16 = sshll.u32 [#allocation2], 4
      %s17 = int_to_ptr.vmem [resolvable:$true] %s16
      %22 = dma.hbm_to_vmem [thread:$0]  %s0, 256, %s17, [#allocation3], 128, 128, 8
    $region5: #{tpu_custom_call.1} parent=1 // pred_fallthru
      _
    // Predicated region
    $region6: #{tpu_custom_call.1} parent=1 // pred_check
      _
    $region7: #{tpu_custom_call.1} parent=1 // pred_check_branch
      %24 = sbr.rel (0) target = $region9
    $region8: #{tpu_custom_call.1} parent=1 // pred_region
      %s26 = ssub.s32 256, 256
      %27 = vsyncadd [#allocation6], %s26
      %s28 = sshll.u32 [#allocation5], 4
      %s29 = int_to_ptr.vmem [resolvable:$true] %s28
      %34 = dma.hbm_to_vmem [thread:$0]  %s1, 256, %s29, [#allocation6], 64, 64, 4
    $region9: #{tpu_custom_call.1} parent=1 // pred_fallthru
      _
    // Predicated region
    $region10: #{tpu_custom_call.1} parent=1 // pred_check
      _
    $region11: #{tpu_custom_call.1} parent=1 // pred_check_branch
      %36 = sbr.rel (0) target = $region13
    $region12: #{tpu_custom_call.1} parent=1 // pred_region
      _
    $region13: #{tpu_custom_call.1} parent=1 // pred_fallthru
      _
    // Predicated region
    $region14: #{tpu_custom_call.1} parent=1 // pred_check
      _
    $region15: #{tpu_custom_call.1} parent=1 // pred_check_branch
      %38 = sbr.rel (0) target = $region17
    $region16: #{tpu_custom_call.1} parent=1 // pred_region
      %39 = dma.done [#allocation3], 256
    $region17: #{tpu_custom_call.1} parent=1 // pred_fallthru
      _
    // Predicated region
    $region18: #{tpu_custom_call.1} parent=1 // pred_check
      _
    $region19: #{tpu_custom_call.1} parent=1 // pred_check_branch
      %41 = sbr.rel (0) target = $region21
    $region20: #{tpu_custom_call.1} parent=1 // pred_region
      %42 = dma.done [#allocation6], 256
    $region21: #{tpu_custom_call.1} parent=1 // pred_fallthru
      _
    %v44 = vld [vmem:[#allocation2] sm:$0xff]
    %v45 = vld [vmem:[#allocation2 + $0x8] sm:$0xff]
    %v46 = vpack.c.bf16 %v45, %v44
    %v47 = vld [vmem:[#allocation5] sm:$0xf]
    %v48 = vld [vmem:[#allocation5 + $0x4] sm:$0xf]
    %v49 = vld [vmem:[#allocation5 + $0x8] sm:$0xf]
    %v50 = vld [vmem:[#allocation5 + $0xc] sm:$0xf]
    %v51 = vld [vmem:[%s2] sm:$0x1]
    %v53 = vlaneseq
    %v54 = vshrl.u32 %v53, 7
    %v55 = vsub.s32 0, %v54
    %v56 = vrot.slane %v51, %v55
    %v62 = vunpack.c.l.b16 %v47
    %v63 = vunpack.c.l.b16 %v48
    %v64 = vunpack.c.l.b16 %v49
    %v65 = vunpack.c.l.b16 %v50
    %v66 = vpack.c.b16 %v63, %v62
    %v67 = vpack.c.b16 %v65, %v64
    %vm70 = vcmask 261120
    %v72 = vsel %vm70, %v46, 0
    %74 = vmatprep.subr.bf16.mxu0 0
    %75 = vmatpush1.bf16.msra.mxu0 %v66
    %76 = vmatprep.subr.bf16.mxu0 0
    %77 = vmatpush1.bf16.msra.mxu0 %v67
    %78 = vmatprep.subr.bf16.mxu0 0
    %79 = vmatpush1.bf16.msra.mxu0 0
    %80 = vmatprep.subr.bf16.mxu0 0
    %81 = vmatpush1.bf16.msra.mxu0 0
    %82 = vmatprep.subr.bf16.mxu0 0
    %83 = vmatpush1.bf16.msra.mxu0 0
    %84 = vmatprep.subr.bf16.mxu0 0
    %85 = vmatpush1.bf16.msra.mxu0 0
    %86 = vmatprep.subr.bf16.mxu0 0
    %87 = vmatpush1.bf16.msra.mxu0 0
    %88 = vmatprep.subr.bf16.mxu0 0
    %89 = vmatpush1.bf16.msra.mxu0 0
    %90 = vmatprep.subr.bf16.mxu0 0
    %91 = vmatpush1.bf16.msra.mxu0 0
    %92 = vmatprep.subr.bf16.mxu0 0
    %93 = vmatpush1.bf16.msra.mxu0 0
    %94 = vmatprep.subr.bf16.mxu0 0
    %95 = vmatpush1.bf16.msra.mxu0 0
    %96 = vmatprep.subr.bf16.mxu0 0
    %97 = vmatpush1.bf16.msra.mxu0 0
    %98 = vmatprep.subr.bf16.mxu0 0
    %99 = vmatpush1.bf16.msra.mxu0 0
    %100 = vmatprep.subr.bf16.mxu0 0
    %101 = vmatpush1.bf16.msra.mxu0 0
    %102 = vmatprep.subr.bf16.mxu0 0
    %103 = vmatpush1.bf16.msra.mxu0 0
    %104 = vmatprep.subr.bf16.mxu0 0
    %105 = vmatpush1.bf16.msra.mxu0 0
    %106 = vmatprep.mubr.bf16.mxu0 0
    %107 = vmatmul.mubr.bf16.gmra.mrb[0].mxu0 %v72
    %v108 = vpop.f32.mrb[0].mxu0
    %v109 = vadd.f32 %v56, %v108
    %v110 = vpop.f32.mrb[0].mxu0
    %v111 = vpop.f32.mrb[0].mxu0
    %v112 = vadd.f32 %v56, %v111
    %v113 = vpop.f32.mrb[0].mxu0
    %114 = vdwg.mxu0
    %v115 = vpack.c.bf16 %v112, %v109
    %v117 = vunpack.c.l.b16 %v115
    %v118 = vunpack.c.h.b16 %v115
    %v119 = vpack.c.b16 %v117, %v117
    %v120 = vpack.c.b16 %v118, %v118
    %vm123 = vcmask 781312
    %124 = vst.msk [vmem:[#allocation7] sm:$0xf] %vm123, %v119
    %125 = vst.msk [vmem:[#allocation7 + $0x4] sm:$0xf] %vm123, %v120
    // Predicated region
    $region22: #{tpu_custom_call.1} parent=1 // pred_check
      _
    $region23: #{tpu_custom_call.1} parent=1 // pred_check_branch
      %127 = sbr.rel (0) target = $region25
    $region24: #{tpu_custom_call.1} parent=1 // pred_region
      %s129 = ssub.s32 128, 128
      %130 = vsyncadd [#allocation4], %s129
      %s131 = sshll.u32 [#allocation7], 4
      %s132 = int_to_ptr.vmem [resolvable:$true] %s131
      %137 = dma.vmem_to_hbm [thread:$0]  %s132, 128, %s3, [#allocation4], 64, 64, 4
    $region25: #{tpu_custom_call.1} parent=1 // pred_fallthru
      _
    // Predicated region
    $region26: #{tpu_custom_call.1} parent=1 // pred_check
      _
    $region27: #{tpu_custom_call.1} parent=1 // pred_check_branch
      %139 = sbr.rel (0) target = $region29
    $region28: #{tpu_custom_call.1} parent=1 // pred_region
      %140 = dma.done [#allocation4], 128
    $region29: #{tpu_custom_call.1} parent=1 // pred_fallthru
      _
    %141 = vsyncpa [#allocation3], 1
    %142 = vsyncpa [#allocation6], 1
    %143 = vsyncpa [#allocation4], 1

// kernel: tpu_custom_call.1
$region0: #{tpu_custom_call.1}
  #allocation0 [shape = 'u32[]', space=smem, size = 0x4, offset = 0x4, fixed_abs, tag = 'smem constant byte address 0x4 - core index']
  #allocation1 [shape = 'u32[144,128]{1,0:T(1,128)}', space=vmem, size = 0x12000, scoped, tag = 'internal scratch']
  %s0 = inlined_call_operand.hbm [shape: f32[16,32], index: 0, kind: input, shape index: {}]
  %s1 = inlined_call_operand.hbm [shape: bf16[32,96], index: 1, kind: input, shape index: {}]
  %s2 = inlined_call_operand.vmem [shape: f32[1,96], index: 2, kind: input, shape index: {}]
  %s3 = inlined_call_operand.hbm [shape: bf16[16,96], index: 3, kind: output, shape index: {}]
  %s4 = sld [smem:[#allocation0]]
  $region30: #{tpu_custom_call.1} parent=0
    _
  %s6 = ssub.s32 1, %s4
  %s7 = scalar_select 0, %s6, %s4
  $region1: #{tpu_custom_call.1} parent=0
    #allocation2 [shape = 'u8[8192]{0}', space=vmem, size = 0x2000, scoped, tag = 'input window, operand 0, single buffered']
    #allocation3 [shape = 's32[1]{0}', space=sflag, size = 0x4, scoped, tag = 'scoped memory for tpu_custom_call.1']
    #allocation4 [shape = 's32[1]{0}', space=sflag, size = 0x4, scoped, tag = 'scoped memory for tpu_custom_call.1']
    #allocation5 [shape = 'u8[8192]{0}', space=vmem, size = 0x2000, scoped, tag = 'input window, operand 1, single buffered']
    #allocation6 [shape = 's32[1]{0}', space=sflag, size = 0x4, scoped, tag = 'scoped memory for tpu_custom_call.1']
    #allocation7 [shape = 'u8[4096]{0}', space=vmem, size = 0x1000, scoped, tag = 'output window, operand 0, single buffered']
    %8 = vsyncpa [#allocation3], 0
    %9 = vsyncpa [#allocation6], 0
    %10 = vsyncpa [#allocation4], 0
    // Predicated region
    $region2: #{tpu_custom_call.1} parent=1 // pred_check
      _
    $region3: #{tpu_custom_call.1} parent=1 // pred_check_branch
      %12 = sbr.rel (0) target = $region5
    $region4: #{tpu_custom_call.1} parent=1 // pred_region
      %s14 = ssub.s32 256, 256
      %15 = vsyncadd [#allocation3], %s14
      %s16 = sshll.u32 [#allocation2], 4
      %s17 = int_to_ptr.vmem [resolvable:$true] %s16
      %22 = dma.hbm_to_vmem [thread:$0]  %s0, 256, %s17, [#allocation3], 128, 128, 8
    $region5: #{tpu_custom_call.1} parent=1 // pred_fallthru
      _
    // Predicated region
    $region6: #{tpu_custom_call.1} parent=1 // pred_check
      _
    $region7: #{tpu_custom_call.1} parent=1 // pred_check_branch
      %24 = sbr.rel (0) target = $region9
    $region8: #{tpu_custom_call.1} parent=1 // pred_region
      %s26 = ssub.s32 256, 256
      %27 = vsyncadd [#allocation6], %s26
      %s28 = sshll.u32 [#allocation5], 4
      %s29 = int_to_ptr.vmem [resolvable:$true] %s28
      %34 = dma.hbm_to_vmem [thread:$0]  %s1, 256, %s29, [#allocation6], 64, 64, 4
    $region9: #{tpu_custom_call.1} parent=1 // pred_fallthru
      _
    // Predicated region
    $region10: #{tpu_custom_call.1} parent=1 // pred_check
      _
    $region11: #{tpu_custom_call.1} parent=1 // pred_check_branch
      %36 = sbr.rel (0) target = $region13
    $region12: #{tpu_custom_call.1} parent=1 // pred_region
      _
    $region13: #{tpu_custom_call.1} parent=1 // pred_fallthru
      _
    // Predicated region
    $region14: #{tpu_custom_call.1} parent=1 // pred_check
      _
    $region15: #{tpu_custom_call.1} parent=1 // pred_check_branch
      %38 = sbr.rel (0) target = $region17
    $region16: #{tpu_custom_call.1} parent=1 // pred_region
      %39 = dma.done [#allocation3], 256
    $region17: #{tpu_custom_call.1} parent=1 // pred_fallthru
      _
    // Predicated region
    $region18: #{tpu_custom_call.1} parent=1 // pred_check
      _
    $region19: #{tpu_custom_call.1} parent=1 // pred_check_branch
      %41 = sbr.rel (0) target = $region21
    $region20: #{tpu_custom_call.1} parent=1 // pred_region
      %42 = dma.done [#allocation6], 256
    $region21: #{tpu_custom_call.1} parent=1 // pred_fallthru
      _
    %v44 = vld [vmem:[#allocation2] sm:$0xff]
    %v45 = vld [vmem:[#allocation2 + $0x8] sm:$0xff]
    %v46 = vpack.c.bf16 %v45, %v44
    %v47 = vld [vmem:[#allocation5] sm:$0xf]
    %v48 = vld [vmem:[#allocation5 + $0x4] sm:$0xf]
    %v49 = vld [vmem:[#allocation5 + $0x8] sm:$0xf]
    %v50 = vld [vmem:[#allocation5 + $0xc] sm:$0xf]
    %v51 = vld [vmem:[%s2] sm:$0x1]
    %v53 = vlaneseq
    %v54 = vshrl.u32 %v53, 7
    %v55 = vsub.s32 0, %v54
    %v56 = vrot.slane %v51, %v55
    %v62 = vunpack.c.l.b16 %v47
    %v63 = vunpack.c.l.b16 %v48
    %v64 = vunpack.c.l.b16 %v49
    %v65 = vunpack.c.l.b16 %v50
    %v66 = vpack.c.b16 %v63, %v62
    %v67 = vpack.c.b16 %v65, %v64
    %vm70 = vcmask 261120
    %v72 = vsel %vm70, %v46, 0
    %74 = vmatprep.subr.bf16.mxu0 0
    %75 = vmatpush1.bf16.msra.mxu0 %v66
    %76 = vmatprep.subr.bf16.mxu0 0
    %77 = vmatpush1.bf16.msra.mxu0 %v67
    %78 = vmatprep.subr.bf16.mxu0 0
    %79 = vmatpush1.bf16.msra.mxu0 0
    %80 = vmatprep.subr.bf16.mxu0 0
    %81 = vmatpush1.bf16.msra.mxu0 0
    %82 = vmatprep.subr.bf16.mxu0 0
    %83 = vmatpush1.bf16.msra.mxu0 0
    %84 = vmatprep.subr.bf16.mxu0 0
    %85 = vmatpush1.bf16.msra.mxu0 0
    %86 = vmatprep.subr.bf16.mxu0 0
    %87 = vmatpush1.bf16.msra.mxu0 0
    %88 = vmatprep.subr.bf16.mxu0 0
    %89 = vmatpush1.bf16.msra.mxu0 0
    %90 = vmatprep.subr.bf16.mxu0 0
    %91 = vmatpush1.bf16.msra.mxu0 0
    %92 = vmatprep.subr.bf16.mxu0 0
    %93 = vmatpush1.bf16.msra.mxu0 0
    %94 = vmatprep.subr.bf16.mxu0 0
    %95 = vmatpush1.bf16.msra.mxu0 0
    %96 = vmatprep.subr.bf16.mxu0 0
    %97 = vmatpush1.bf16.msra.mxu0 0
    %98 = vmatprep.subr.bf16.mxu0 0
    %99 = vmatpush1.bf16.msra.mxu0 0
    %100 = vmatprep.subr.bf16.mxu0 0
    %101 = vmatpush1.bf16.msra.mxu0 0
    %102 = vmatprep.subr.bf16.mxu0 0
    %103 = vmatpush1.bf16.msra.mxu0 0
    %104 = vmatprep.subr.bf16.mxu0 0
    %105 = vmatpush1.bf16.msra.mxu0 0
    %106 = vmatprep.mubr.bf16.mxu0 0
    %107 = vmatmul.mubr.bf16.gmra.mrb[0].mxu0 %v72
    %v108 = vpop.f32.mrb[0].mxu0
    %v109 = vadd.f32 %v56, %v108
    %v110 = vpop.f32.mrb[0].mxu0
    %v111 = vpop.f32.mrb[0].mxu0
    %v112 = vadd.f32 %v56, %v111
    %v113 = vpop.f32.mrb[0].mxu0
    %114 = vdwg.mxu0
    %v115 = vpack.c.bf16 %v112, %v109
    %v117 = vunpack.c.l.b16 %v115
    %v118 = vunpack.c.h.b16 %v115
    %v119 = vpack.c.b16 %v117, %v117
    %v120 = vpack.c.b16 %v118, %v118
    %vm123 = vcmask 781312
    %124 = vst.msk [vmem:[#allocation7] sm:$0xf] %vm123, %v119
    %125 = vst.msk [vmem:[#allocation7 + $0x4] sm:$0xf] %vm123, %v120
    // Predicated region
    $region22: #{tpu_custom_call.1} parent=1 // pred_check
      _
    $region23: #{tpu_custom_call.1} parent=1 // pred_check_branch
      %127 = sbr.rel (0) target = $region25
    $region24: #{tpu_custom_call.1} parent=1 // pred_region
      %s129 = ssub.s32 128, 128
      %130 = vsyncadd [#allocation4], %s129
      %s131 = sshll.u32 [#allocation7], 4
      %s132 = int_to_ptr.vmem [resolvable:$true] %s131
      %137 = dma.vmem_to_hbm [thread:$0]  %s132, 128, %s3, [#allocation4], 64, 64, 4
    $region25: #{tpu_custom_call.1} parent=1 // pred_fallthru
      _
    // Predicated region
    $region26: #{tpu_custom_call.1} parent=1 // pred_check
      _
    $region27: #{tpu_custom_call.1} parent=1 // pred_check_branch
      %139 = sbr.rel (0) target = $region29
    $region28: #{tpu_custom_call.1} parent=1 // pred_region
      %140 = dma.done [#allocation4], 128
    $region29: #{tpu_custom_call.1} parent=1 // pred_fallthru
      _
    %141 = vsyncpa [#allocation3], 1
    %142 = vsyncpa [#allocation6], 1
    %143 = vsyncpa [#allocation4], 1

</llo_original>
